<compile_context>
chip_gen: v5e
topology: v5e:2x2
jax: 0.10.0
libtpu: 0.0.40
codegen_flags: <defaults>
</compile_context>

<pallas_src>
import functools

import jax
import jax.numpy as jnp
from jax.experimental import pallas as pl
from jax.experimental.pallas import tpu as pltpu


_INV_SQRT2 = 0.7071067811865476  # 1/sqrt(2), for exact (erf) GELU


def _round_up(x: int, m: int) -> int:
    return ((x + m - 1) // m) * m


def _gelu_f32(h, approximate):
    if approximate:
        # tanh approximation -> transcendental goes to the EUP slot.
        return jax.nn.gelu(h, approximate=True)
    # Exact GELU (torch F.gelu default, approximate='none').
    return 0.5 * h * (1.0 + jax.lax.erf(h * jnp.float32(_INV_SQRT2)))


# ---------------------------------------------------------------------------
# Kernels
# ---------------------------------------------------------------------------

def _ffn_resident_kernel(x_ref, w1_ref, b1_ref, w2_ref, b2_ref, o_ref, *,
                         approximate_gelu):
    # x_ref: (TM, D_pad)   w1_ref: (D_pad, H_pad)   b1_ref: (1, H_pad)
    # w2_ref: (H_pad, D_pad)   b2_ref: (1, D_pad)   o_ref: (TM, D_pad)
    h = jnp.dot(x_ref[...], w1_ref[...], preferred_element_type=jnp.float32)
    h = h + b1_ref[...].astype(jnp.float32)
    h = _gelu_f32(h, approximate_gelu)
    h = h.astype(w2_ref.dtype)  # native-dtype MXU operand for the 2nd matmul
    out = jnp.dot(h, w2_ref[...], preferred_element_type=jnp.float32)
    # Dropout (eval mode) == identity.
    o_ref[...] = (out + b2_ref[...].astype(jnp.float32)).astype(o_ref.dtype)


def _ffn_tiled_kernel(x_ref, w1_ref, b1_ref, w2_ref, b2_ref, o_ref, *scratch,
                      approximate_gelu):
    # Hidden-tiled path: accumulate over the trailing hidden grid axis.
    # If no scratch was allocated, the output itself is the f32 accumulator.
    acc_ref = scratch[0] if scratch else o_ref
    h_idx = pl.program_id(1)

    @pl.when(h_idx == 0)
    def _():
        acc_ref[...] = jnp.zeros_like(acc_ref)

    h = jnp.dot(x_ref[...], w1_ref[...], preferred_element_type=jnp.float32)
    h = h + b1_ref[...].astype(jnp.float32)
    h = _gelu_f32(h, approximate_gelu)
    h = h.astype(w2_ref.dtype)
    acc_ref[...] += jnp.dot(h, w2_ref[...], preferred_element_type=jnp.float32)

    @pl.when(h_idx == pl.num_programs(1) - 1)
    def _():
        if scratch:
            o_ref[...] = (acc_ref[...]
                          + b2_ref[...].astype(jnp.float32)).astype(o_ref.dtype)
        else:
            # acc_ref is o_ref (f32 output): just add bias once at writeback.
            o_ref[...] = o_ref[...] + b2_ref[...].astype(o_ref.dtype)


# ---------------------------------------------------------------------------
# Parameter padding (do ONCE at init, outside the per-call path)
# ---------------------------------------------------------------------------

def pad_ffn_params(w1, b1, w2, b2, *, hidden_multiple=512):
    """Pad params to lane-dense shapes. Zero padding is numerically exact
    (GELU(0)=0 multiplies into zero W2 rows; padded d_model columns are sliced
    off). Padding hidden up to a slab multiple (rather than shrinking the slab
    later) keeps per-step DMAs large for awkward hidden sizes."""
    d_model, hidden = w1.shape
    d_pad = _round_up(d_model, 128)
    h_pad = _round_up(hidden, max(128, hidden_multiple))
    w1p = jnp.pad(w1, ((0, d_pad - d_model), (0, h_pad - hidden)))
    b1p = jnp.pad(jnp.reshape(b1, (1, hidden)), ((0, 0), (0, h_pad - hidden)))
    w2p = jnp.pad(w2, ((0, h_pad - hidden), (0, d_pad - d_model)))
    b2p = jnp.pad(jnp.reshape(b2, (1, d_model)), ((0, 0), (0, d_pad - d_model)))
    return w1p, b1p, w2p, b2p


def _vmem_capacity_bytes() -> int:
    try:
        return int(pltpu.get_tpu_info().vmem_capacity_bytes)
    except Exception:
        return 64 * 1024 * 1024  # conservative (v7x per-TC VMEM)


# ---------------------------------------------------------------------------
# Wrapper
# ---------------------------------------------------------------------------

@functools.partial(
    jax.jit,
    static_argnames=("block_m", "block_h", "approximate_gelu", "weights_resident"))
def feed_forward_network(x, w1p, b1p, w2p, b2p, *, block_m=512, block_h=512,
                         approximate_gelu=False, weights_resident=None):
    """x: (batch, seq, d_model) -> (batch, seq, d_model).

    w1p/b1p/w2p/b2p are the pre-padded parameters from pad_ffn_params.
    weights_resident: None = auto (by VMEM footprint), True/False to force a path.
    Note: if weights arrive as f32 and accuracy allows, cast params (and x) to
    bf16 before calling for full MXU rate / halved weight traffic.
    """
    batch, seq, d_model = x.shape
    d_pad, h_pad = w1p.shape
    m = batch * seq

    x_bytes = x.dtype.itemsize
    w_bytes = w1p.dtype.itemsize
    out_dtype = x.dtype
    o_bytes = out_dtype.itemsize
    acc_in_out = (out_dtype == jnp.float32)

    # Sublane multiple of the row tile: 8 for f32, 16 for bf16, 32 for int8/fp8.
    sublane = max(8, 32 // x_bytes)

    vmem_cap = _vmem_capacity_bytes()
    budget = int(vmem_cap * 0.80)

    tm = min(_round_up(block_m, sublane), _round_up(m, sublane))

    def resident_footprint(tm_):
        return (2 * tm_ * d_pad * x_bytes              # x tile (double-buffered)
                + 2 * tm_ * d_pad * o_bytes            # out tile (double-buffered)
                + 2 * 2 * d_pad * h_pad * w_bytes      # W1 + W2 (count 2 buffers)
                + tm_ * h_pad * 4                      # f32 hidden intermediate
                + 4 * (h_pad + d_pad) * w_bytes)       # biases

    def tiled_footprint(tm_, th_):
        return (2 * tm_ * d_pad * x_bytes
                + 2 * tm_ * d_pad * o_bytes
                + (0 if acc_in_out else tm_ * d_pad * 4)   # f32 acc scratch
                + 2 * 2 * d_pad * th_ * w_bytes            # W1/W2 slabs, 2-buffered
                + 4 * (th_ + d_pad) * w_bytes
                + tm_ * th_ * 4)                           # f32 hidden slab

    use_resident = weights_resident
    if use_resident is None:
        use_resident = resident_footprint(tm) <= budget

    if use_resident:
        # Weights DMA'd once and kept resident across all row tiles.
        footprint = resident_footprint(tm)
        m_pad = _round_up(m, tm)
        grid = (m_pad // tm,)
        kernel = functools.partial(_ffn_resident_kernel,
                                   approximate_gelu=approximate_gelu)
        grid_spec = pltpu.PrefetchScalarGridSpec(
            num_scalar_prefetch=0,
            grid=grid,
            in_specs=[
                pl.BlockSpec((tm, d_pad), lambda i: (i, 0)),     # x row tile
                pl.BlockSpec((d_pad, h_pad), lambda i: (0, 0)),  # W1 (resident)
                pl.BlockSpec((1, h_pad), lambda i: (0, 0)),      # b1 (resident)
                pl.BlockSpec((h_pad, d_pad), lambda i: (0, 0)),  # W2 (resident)
                pl.BlockSpec((1, d_pad), lambda i: (0, 0)),      # b2 (resident)
            ],
            out_specs=pl.BlockSpec((tm, d_pad), lambda i: (i, 0)),
            scratch_shapes=[],
        )
        dim_sem = ("parallel",)
        weight_reads = 1
    else:
        # Hidden-streaming fallback: hidden slab = largest 128-multiple divisor
        # of h_pad that is <= block_h (pre-pad hidden to a block_h multiple in
        # pad_ffn_params to keep this at block_h).
        th = min(_round_up(block_h, 128), h_pad)
        while h_pad % th:
            th -= 128
        # Shrink the row tile until the double-buffered footprint fits VMEM
        # (keeps v7x's 64 MiB budget safe without changing the call site).
        while tm > sublane and tiled_footprint(tm, th) > budget:
            tm = max(sublane, _round_up(tm // 2, sublane))
        footprint = tiled_footprint(tm, th)
        m_pad = _round_up(m, tm)
        grid = (m_pad // tm, h_pad // th)
        kernel = functools.partial(_ffn_tiled_kernel,
                                   approximate_gelu=approximate_gelu)
        grid_spec = pltpu.PrefetchScalarGridSpec(
            num_scalar_prefetch=0,
            grid=grid,
            in_specs=[
                pl.BlockSpec((tm, d_pad), lambda i, h: (i, 0)),   # x row tile
                pl.BlockSpec((d_pad, th), lambda i, h: (0, h)),   # W1 hidden slab
                pl.BlockSpec((1, th), lambda i, h: (0, h)),       # b1 slab
                pl.BlockSpec((th, d_pad), lambda i, h: (h, 0)),   # W2 hidden slab
                pl.BlockSpec((1, d_pad), lambda i, h: (0, 0)),    # b2 (resident)
            ],
            out_specs=pl.BlockSpec((tm, d_pad), lambda i, h: (i, 0)),
            scratch_shapes=([] if acc_in_out
                            else [pltpu.VMEM((tm, d_pad), jnp.float32)]),
        )
        dim_sem = ("parallel", "arbitrary")
        weight_reads = grid[0]

    # Explicit VMEM limit: footprint + ~30% headroom, capped below physical VMEM.
    vmem_limit = int(min(0.9 * vmem_cap,
                         max(1.3 * footprint, 32 * 1024 * 1024)))

    cost = pl.CostEstimate(
        flops=4 * m_pad * d_pad * h_pad,                       # two matmuls
        transcendentals=m_pad * h_pad,                         # GELU per hidden elem
        bytes_accessed=(m_pad * d_pad * (x_bytes + o_bytes)    # x in + out
                        + weight_reads * 2 * d_pad * h_pad * w_bytes
                        + (h_pad + d_pad) * w_bytes),
    )

    # Activation padding (zero rows/cols -> exact; sliced off below).
    x2d = jnp.pad(x.reshape(m, d_model),
                  ((0, m_pad - m), (0, d_pad - d_model)))

    out2d = pl.pallas_call(
        kernel,
        out_shape=jax.ShapeDtypeStruct((m_pad, d_pad), out_dtype),
        grid_spec=grid_spec,
        compiler_params=pltpu.CompilerParams(
            dimension_semantics=dim_sem,
            vmem_limit_bytes=vmem_limit),
        cost_estimate=cost,
    )(x2d, w1p, b1p, w2p, b2p)

    return out2d[:m, :d_model].reshape(batch, seq, d_model)


# ---------------------------------------------------------------------------
# Demo / self-test
# ---------------------------------------------------------------------------

def _init_linear(key, in_dim, out_dim):
    """Deterministic PyTorch-style nn.Linear init (kaiming-uniform-ish)."""
    kw, kb = jax.random.split(key)
    bound = 1.0 / jnp.sqrt(in_dim)
    # Stored transposed relative to torch (in_dim, out_dim) so kernel does x @ W.
    w = jax.random.uniform(kw, (in_dim, out_dim), jnp.float32, -bound, bound)
    b = jax.random.uniform(kb, (out_dim,), jnp.float32, -bound, bound)
    return w, b


def _reference(x, w1, b1, w2, b2):
    h = jnp.dot(x, w1) + b1
    h = jax.nn.gelu(h, approximate=False)
    return jnp.dot(h, w2) + b2  # dropout is identity in eval mode


if __name__ == "__main__":
    # config: d_model=32, hidden_dim=64, ffn_dropout=0.1 (eval mode -> identity)
    batch, seq, d_model, hidden = 2, 8, 32, 64

    key = jax.random.PRNGKey(0)
    kx, k1, k2 = jax.random.split(key, 3)

    x = jax.random.normal(kx, (batch, seq, d_model), jnp.float32)
    w1, b1 = _init_linear(k1, d_model, hidden)
    w2, b2 = _init_linear(k2, hidden, d_model)

    # Pad parameters ONCE (outside the per-call jitted path).
    w1p, b1p, w2p, b2p = pad_ffn_params(w1, b1, w2, b2, hidden_multiple=256)

    ref = _reference(x, w1, b1, w2, b2)

    # Auto path (weights-resident at this size).
    out = feed_forward_network(x, w1p, b1p, w2p, b2p)
    out = jax.block_until_ready(out)
    assert out.shape == (batch, seq, d_model)
    assert jnp.allclose(out, ref, atol=1e-4, rtol=1e-4), "resident path mismatch"

    # Also exercise the hidden-streaming path (2 hidden slabs -> tests the
    # pl.when init/accumulate/finalize sequence and in-place f32 accumulation).
    out_tiled = feed_forward_network(x, w1p, b1p, w2p, b2p,
                                     block_h=128, weights_resident=False)
    out_tiled = jax.block_until_ready(out_tiled)
    assert jnp.allclose(out_tiled, ref, atol=1e-4, rtol=1e-4), "tiled path mismatch"

    print("KERNEL_OK")
</pallas_src>

<mosaic_0001>
module attributes {stable_mosaic.version = 11 : i64} {
  func.func @_ffn_resident_kernel(%arg0: i32, %arg1: memref<16x128xf32, #tpu.memory_space<vmem>>, %arg2: memref<128x256xf32, #tpu.memory_space<vmem>>, %arg3: memref<1x256xf32, #tpu.memory_space<vmem>>, %arg4: memref<256x128xf32, #tpu.memory_space<vmem>>, %arg5: memref<1x128xf32, #tpu.memory_space<vmem>>, %arg6: memref<16x128xf32, #tpu.memory_space<vmem>>) attributes {dimension_semantics = [#tpu.dimension_semantics<parallel>], iteration_bounds = array<i64: 1>, scalar_prefetch = 0 : i64, scratch_operands = 0 : i64, tpu.core_type = #tpu.core_type<tc>, window_params = [{transform_indices = @transform_0, window_bounds = array<i64: 16, 128>}, {pipeline_mode = #tpu.pipeline_mode<synchronous>, transform_indices = @transform_1, window_bounds = array<i64: 128, 256>}, {pipeline_mode = #tpu.pipeline_mode<synchronous>, transform_indices = @transform_2, window_bounds = array<i64: 1, 256>}, {pipeline_mode = #tpu.pipeline_mode<synchronous>, transform_indices = @transform_3, window_bounds = array<i64: 256, 128>}, {pipeline_mode = #tpu.pipeline_mode<synchronous>, transform_indices = @transform_4, window_bounds = array<i64: 1, 128>}, {transform_indices = @transform_5, window_bounds = array<i64: 16, 128>}]} {
    %c0 = arith.constant 0 : index
    %c0_0 = arith.constant 0 : index
    %0 = vector.load %arg1[%c0, %c0_0] : memref<16x128xf32, #tpu.memory_space<vmem>>, vector<16x128xf32>
    %c0_1 = arith.constant 0 : index
    %c0_2 = arith.constant 0 : index
    %1 = vector.load %arg2[%c0_1, %c0_2] : memref<128x256xf32, #tpu.memory_space<vmem>>, vector<128x256xf32>
    %cst = arith.constant dense<0.000000e+00> : vector<16x256xf32>
    %2 = tpu.matmul %0, %1, %cst {dimension_numbers = #tpu.dot_dimension_numbers<[1], [0], [0], [1], [0, 0, 1, 1], [], []>} : vector<16x128xf32>, vector<128x256xf32>, vector<16x256xf32> -> vector<16x256xf32>
    %c0_3 = arith.constant 0 : index
    %c0_4 = arith.constant 0 : index
    %3 = vector.load %arg3[%c0_3, %c0_4] : memref<1x256xf32, #tpu.memory_space<vmem>>, vector<1x256xf32>
    %4 = vector.broadcast %3 : vector<1x256xf32> to vector<16x256xf32>
    %5 = arith.addf %2, %4 : vector<16x256xf32>
    %cst_5 = arith.constant 5.000000e-01 : f32
    %6 = vector.broadcast %cst_5 : f32 to vector<16x256xf32>
    %7 = arith.mulf %6, %5 : vector<16x256xf32>
    %cst_6 = arith.constant 0.707106769 : f32
    %8 = vector.broadcast %cst_6 : f32 to vector<16x256xf32>
    %9 = arith.mulf %5, %8 : vector<16x256xf32>
    %10 = math.erf %9 : vector<16x256xf32>
    %cst_7 = arith.constant 1.000000e+00 : f32
    %11 = vector.broadcast %cst_7 : f32 to vector<16x256xf32>
    %12 = arith.addf %11, %10 : vector<16x256xf32>
    %13 = arith.mulf %7, %12 : vector<16x256xf32>
    %c0_8 = arith.constant 0 : index
    %c0_9 = arith.constant 0 : index
    %14 = vector.load %arg4[%c0_8, %c0_9] : memref<256x128xf32, #tpu.memory_space<vmem>>, vector<256x128xf32>
    %cst_10 = arith.constant dense<0.000000e+00> : vector<16x128xf32>
    %15 = tpu.matmul %13, %14, %cst_10 {dimension_numbers = #tpu.dot_dimension_numbers<[1], [0], [0], [1], [0, 0, 1, 1], [], []>} : vector<16x256xf32>, vector<256x128xf32>, vector<16x128xf32> -> vector<16x128xf32>
    %c0_11 = arith.constant 0 : index
    %c0_12 = arith.constant 0 : index
    %16 = vector.load %arg5[%c0_11, %c0_12] : memref<1x128xf32, #tpu.memory_space<vmem>>, vector<1x128xf32>
    %17 = vector.broadcast %16 : vector<1x128xf32> to vector<16x128xf32>
    %18 = arith.addf %15, %17 : vector<16x128xf32>
    %c0_13 = arith.constant 0 : index
    %c0_14 = arith.constant 0 : index
    %19 = vector.load %arg6[%c0_13, %c0_14] : memref<16x128xf32, #tpu.memory_space<vmem>>, vector<16x128xf32>
    tpu.vector_store %arg6[%c0_13, %c0_14], %18 {strides = array<i32>} : memref<16x128xf32, #tpu.memory_space<vmem>>, vector<16x128xf32>,
    return
  }
  func.func @transform_0(%arg0: i32) -> (i32, i32) {
    %c0_i32 = arith.constant 0 : i32
    %c0_i32_0 = arith.constant 0 : i32
    return %arg0, %c0_i32 : i32, i32
  }
  func.func @transform_1(%arg0: i32) -> (i32, i32) {
    %c0_i32 = arith.constant 0 : i32
    %c0_i32_0 = arith.constant 0 : i32
    %c0_i32_1 = arith.constant 0 : i32
    return %c0_i32, %c0_i32_0 : i32, i32
  }
  func.func @transform_2(%arg0: i32) -> (i32, i32) {
    %c0_i32 = arith.constant 0 : i32
    %c0_i32_0 = arith.constant 0 : i32
    %c0_i32_1 = arith.constant 0 : i32
    return %c0_i32, %c0_i32_0 : i32, i32
  }
  func.func @transform_3(%arg0: i32) -> (i32, i32) {
    %c0_i32 = arith.constant 0 : i32
    %c0_i32_0 = arith.constant 0 : i32
    %c0_i32_1 = arith.constant 0 : i32
    return %c0_i32, %c0_i32_0 : i32, i32
  }
  func.func @transform_4(%arg0: i32) -> (i32, i32) {
    %c0_i32 = arith.constant 0 : i32
    %c0_i32_0 = arith.constant 0 : i32
    %c0_i32_1 = arith.constant 0 : i32
    return %c0_i32, %c0_i32_0 : i32, i32
  }
  func.func @transform_5(%arg0: i32) -> (i32, i32) {
    %c0_i32 = arith.constant 0 : i32
    %c0_i32_0 = arith.constant 0 : i32
    return %arg0, %c0_i32 : i32, i32
  }
}

</mosaic_0001>

<llo_original>
// kernel: feed_forward_network.1
$region0: #{feed_forward_network.1}
  #allocation0 [shape = 'u32[]', space=smem, size = 0x4, offset = 0x4, fixed_abs, tag = 'smem constant byte address 0x4 - core index']
  #allocation1 [shape = 'u32[72,128]{1,0:T(1,128)}', space=vmem, size = 0x9000, scoped, tag = 'internal scratch']
  %s0 = inlined_call_operand.vmem [shape: f32[16,128], index: 0, kind: input, shape index: {}]
  %s1 = inlined_call_operand.hbm [shape: f32[128,256], index: 1, kind: input, shape index: {}]
  %s2 = inlined_call_operand.vmem [shape: f32[1,256], index: 2, kind: input, shape index: {}]
  %s3 = inlined_call_operand.hbm [shape: f32[256,128], index: 3, kind: input, shape index: {}]
  %s4 = inlined_call_operand.vmem [shape: f32[1,128], index: 4, kind: input, shape index: {}]
  %s5 = inlined_call_operand.vmem [shape: f32[16,128], index: 5, kind: output, shape index: {}]
  %s6 = sld [smem:[#allocation0]]
  $region38: #{feed_forward_network.1} parent=0
    _
  %s8 = ssub.s32 1, %s6
  %s9 = scalar_select 0, %s8, %s6
  $region1: #{feed_forward_network.1} parent=0
    #allocation2 [shape = 'u8[131072]{0}', space=vmem, size = 0x20000, scoped, tag = 'input window, operand 1, single buffered']
    #allocation3 [shape = 's32[1]{0}', space=sflag, size = 0x4, scoped, tag = 'scoped memory for feed_forward_network.1']
    #allocation4 [shape = 'u8[131072]{0}', space=vmem, size = 0x20000, scoped, tag = 'input window, operand 3, single buffered']
    #allocation5 [shape = 's32[1]{0}', space=sflag, size = 0x4, scoped, tag = 'scoped memory for feed_forward_network.1']
    %10 = vsyncpa [#allocation3], 0
    %11 = vsyncpa [#allocation5], 0
    // Predicated region
    $region2: #{feed_forward_network.1} parent=1 // pred_check
      _
    $region3: #{feed_forward_network.1} parent=1 // pred_check_branch
      %13 = sbr.rel (0) target = $region5
    $region4: #{feed_forward_network.1} parent=1 // pred_region
      _
    $region5: #{feed_forward_network.1} parent=1 // pred_fallthru
      _
    // Predicated region
    $region6: #{feed_forward_network.1} parent=1 // pred_check
      _
    $region7: #{feed_forward_network.1} parent=1 // pred_check_branch
      %15 = sbr.rel (0) target = $region9
    $region8: #{feed_forward_network.1} parent=1 // pred_region
      %17 = vsyncadd [#allocation3], 0
      %s18 = sshll.u32 %s1, 4
      %s19 = int_to_ptr.hbm [resolvable:$true] %s18
      %s20 = sshll.u32 [#allocation2], 4
      %s21 = int_to_ptr.vmem [resolvable:$true] %s20
      %26 = dma.hbm_to_vmem [thread:$0]  %s19, 4096, %s21, [#allocation3], 256, 256, 16
    $region9: #{feed_forward_network.1} parent=1 // pred_fallthru
      _
    // Predicated region
    $region10: #{feed_forward_network.1} parent=1 // pred_check
      _
    $region11: #{feed_forward_network.1} parent=1 // pred_check_branch
      %28 = sbr.rel (0) target = $region13
    $region12: #{feed_forward_network.1} parent=1 // pred_region
      _
    $region13: #{feed_forward_network.1} parent=1 // pred_fallthru
      _
    // Predicated region
    $region14: #{feed_forward_network.1} parent=1 // pred_check
      _
    $region15: #{feed_forward_network.1} parent=1 // pred_check_branch
      %30 = sbr.rel (0) target = $region17
    $region16: #{feed_forward_network.1} parent=1 // pred_region
      %32 = vsyncadd [#allocation5], 0
      %s33 = sshll.u32 %s3, 4
      %s34 = int_to_ptr.hbm [resolvable:$true] %s33
      %s35 = sshll.u32 [#allocation4], 4
      %s36 = int_to_ptr.vmem [resolvable:$true] %s35
      %41 = dma.hbm_to_vmem [thread:$0]  %s34, 4096, %s36, [#allocation5], 128, 128, 8
    $region17: #{feed_forward_network.1} parent=1 // pred_fallthru
      _
    // Predicated region
    $region18: #{feed_forward_network.1} parent=1 // pred_check
      _
    $region19: #{feed_forward_network.1} parent=1 // pred_check_branch
      %43 = sbr.rel (0) target = $region21
    $region20: #{feed_forward_network.1} parent=1 // pred_region
      _
    $region21: #{feed_forward_network.1} parent=1 // pred_fallthru
      _
    // Predicated region
    $region22: #{feed_forward_network.1} parent=1 // pred_check
      _
    $region23: #{feed_forward_network.1} parent=1 // pred_check_branch
      %45 = sbr.rel (0) target = $region25
    $region24: #{feed_forward_network.1} parent=1 // pred_region
      %47 = dma.done [#allocation3], 4096
    $region25: #{feed_forward_network.1} parent=1 // pred_fallthru
      _
    // Predicated region
    $region26: #{feed_forward_network.1} parent=1 // pred_check
      _
    $region27: #{feed_forward_network.1} parent=1 // pred_check_branch
      %49 = sbr.rel (0) target = $region29
    $region28: #{feed_forward_network.1} parent=1 // pred_region
      %51 = dma.done [#allocation5], 4096
    $region29: #{feed_forward_network.1} parent=1 // pred_fallthru
      _
    %v52 = vld [vmem:[%s0] sm:$0xff]
    %v53 = vld [vmem:[%s0 + $0x8] sm:$0xff]
    %v54 = vld [vmem:[#allocation2] sm:$0xff]
    %v55 = vld [vmem:[#allocation2 + $0x8] sm:$0xff]
    %v56 = vld [vmem:[#allocation2 + $0x10] sm:$0xff]
    %v57 = vld [vmem:[#allocation2 + $0x18] sm:$0xff]
    %v58 = vld [vmem:[#allocation2 + $0x20] sm:$0xff]
    %v59 = vld [vmem:[#allocation2 + $0x28] sm:$0xff]
    %v60 = vld [vmem:[#allocation2 + $0x30] sm:$0xff]
    %v61 = vld [vmem:[#allocation2 + $0x38] sm:$0xff]
    %v62 = vld [vmem:[#allocation2 + $0x40] sm:$0xff]
    %v63 = vld [vmem:[#allocation2 + $0x48] sm:$0xff]
    %v64 = vld [vmem:[#allocation2 + $0x50] sm:$0xff]
    %v65 = vld [vmem:[#allocation2 + $0x58] sm:$0xff]
    %v66 = vld [vmem:[#allocation2 + $0x60] sm:$0xff]
    %v67 = vld [vmem:[#allocation2 + $0x68] sm:$0xff]
    %v68 = vld [vmem:[#allocation2 + $0x70] sm:$0xff]
    %v69 = vld [vmem:[#allocation2 + $0x78] sm:$0xff]
    %v70 = vld [vmem:[#allocation2 + $0x80] sm:$0xff]
    %v71 = vld [vmem:[#allocation2 + $0x88] sm:$0xff]
    %v72 = vld [vmem:[#allocation2 + $0x90] sm:$0xff]
    %v73 = vld [vmem:[#allocation2 + $0x98] sm:$0xff]
    %v74 = vld [vmem:[#allocation2 + $0xa0] sm:$0xff]
    %v75 = vld [vmem:[#allocation2 + $0xa8] sm:$0xff]
    %v76 = vld [vmem:[#allocation2 + $0xb0] sm:$0xff]
    %v77 = vld [vmem:[#allocation2 + $0xb8] sm:$0xff]
    %v78 = vld [vmem:[#allocation2 + $0xc0] sm:$0xff]
    %v79 = vld [vmem:[#allocation2 + $0xc8] sm:$0xff]
    %v80 = vld [vmem:[#allocation2 + $0xd0] sm:$0xff]
    %v81 = vld [vmem:[#allocation2 + $0xd8] sm:$0xff]
    %v82 = vld [vmem:[#allocation2 + $0xe0] sm:$0xff]
    %v83 = vld [vmem:[#allocation2 + $0xe8] sm:$0xff]
    %v84 = vld [vmem:[#allocation2 + $0xf0] sm:$0xff]
    %v85 = vld [vmem:[#allocation2 + $0xf8] sm:$0xff]
    %v86 = vld [vmem:[%s2] sm:$0x3]
    %v88 = vperm.slane %v86, 0
    %v89 = vperm.slane %v86, 1
    %92 = vmatpush.msra.mxu0 %v84
    %93 = vmatpush.msra.mxu0 %v82
    %94 = vmatpush.msra.mxu0 %v80
    %95 = vmatpush.msra.mxu0 %v78
    %96 = vmatpush.msra.mxu0 %v76
    %97 = vmatpush.msra.mxu0 %v74
    %98 = vmatpush.msra.mxu0 %v72
    %99 = vmatpush.msra.mxu0 %v70
    %100 = vmatpush.msra.mxu0 %v68
    %101 = vmatpush.msra.mxu0 %v66
    %102 = vmatpush.msra.mxu0 %v64
    %103 = vmatpush.msra.mxu0 %v62
    %104 = vmatpush.msra.mxu0 %v60
    %105 = vmatpush.msra.mxu0 %v58
    %106 = vmatpush.msra.mxu0 %v56
    %107 = vmatpush.msra.mxu0 %v54
    %108 = vmatmul.f32.gmra.mxu0 %v52
    %v109 = vpop.f32.mrf.mxu0
    %v110 = vadd.f32 %v88, %v109
    %111 = vmatmul.f32.gmra.mxu0 %v53
    %v112 = vpop.f32.mrf.mxu0
    %v113 = vadd.f32 %v88, %v112
    %114 = vdwg.mxu0
    %115 = vmatpush.msra.mxu0 %v85
    %116 = vmatpush.msra.mxu0 %v83
    %117 = vmatpush.msra.mxu0 %v81
    %118 = vmatpush.msra.mxu0 %v79
    %119 = vmatpush.msra.mxu0 %v77
    %120 = vmatpush.msra.mxu0 %v75
    %121 = vmatpush.msra.mxu0 %v73
    %122 = vmatpush.msra.mxu0 %v71
    %123 = vmatpush.msra.mxu0 %v69
    %124 = vmatpush.msra.mxu0 %v67
    %125 = vmatpush.msra.mxu0 %v65
    %126 = vmatpush.msra.mxu0 %v63
    %127 = vmatpush.msra.mxu0 %v61
    %128 = vmatpush.msra.mxu0 %v59
    %129 = vmatpush.msra.mxu0 %v57
    %130 = vmatpush.msra.mxu0 %v55
    %131 = vmatmul.f32.gmra.mxu0 %v52
    %v132 = vpop.f32.mrf.mxu0
    %v133 = vadd.f32 %v89, %v132
    %134 = vmatmul.f32.gmra.mxu0 %v53
    %v135 = vpop.f32.mrf.mxu0
    %v136 = vadd.f32 %v89, %v135
    %137 = vdwg.mxu0
    %v138 = vmul.f32 %v110, 0.5
    %v139 = vmul.f32 %v133, 0.5
    %v140 = vmul.f32 %v113, 0.5
    %v141 = vmul.f32 %v136, 0.5
    %v142 = vmul.f32 %v110, 0.70710677
    %v143 = vmul.f32 %v133, 0.70710677
    %v144 = vmul.f32 %v113, 0.70710677
    %v145 = vmul.f32 %v136, 0.70710677
    %v146 = vmul.f32 %v142, %v142
    %v147 = vmin.f32 16.0, %v146
    %v148 = vmul.f32 %v147, 2.1237322e-06
    %v149 = vadd.f32 %v148, 0.00028619796
    %v150 = vmul.f32 %v147, %v149
    %v151 = vadd.f32 %v150, 0.0036580483
    %v152 = vmul.f32 %v147, %v151
    %v153 = vadd.f32 %v152, 0.05243302
    %v154 = vmul.f32 %v147, %v153
    %v155 = vadd.f32 %v154, 0.18741608
    %v156 = vmul.f32 %v147, %v155
    %v157 = vadd.f32 %v156, 1.1283791
    %v158 = vmul.f32 %v142, %v157
    %v159 = vmul.f32 %v147, 3.8918573e-05
    %v160 = vadd.f32 %v159, 0.001143296
    %v161 = vmul.f32 %v147, %v160
    %v162 = vadd.f32 %v161, 0.014752088
    %v163 = vmul.f32 %v147, %v162
    %v164 = vadd.f32 %v163, 0.112945676
    %v165 = vmul.f32 %v147, %v164
    %v166 = vadd.f32 %v165, 0.4994258
    %v167 = vmul.f32 %v147, %v166
    %v168 = vadd.f32 %v167, 1.0
    %v169 = vrcp.pop %v168
    %v170 = vmul.f32 %v168, %v169
    %v171 = vsub.f32 1.0, %v170
    %v172 = vmul.f32 %v169, %v171
    %v173 = vadd.f32 %v169, %v172
    %vm174 = vweird.f32 %v168
    %vm175 = vweird.f32 %v169
    %vm176 = vmor %vm174, %vm175
    %v177 = vsel %vm176, %v169, %v173
    %v178 = vand.u32 2147483647, %v168
    %vm179 = vcmp.eq.f32.partialorder %v178, 8.507059e+37
    %v180 = vand.u32 %v168, 2147483648
    %v181 = vor.u32 1.1754944e-38, %v180
    %v182 = vsel %vm179, %v181, %v177
    %v183 = vmul.f32 %v158, %v182
    %v184 = vmin.f32 %v183, 1.0
    %v185 = vmax.f32 %v184, -1.0
    %v186 = vmul.f32 %v143, %v143
    %v187 = vmin.f32 16.0, %v186
    %v188 = vmul.f32 %v187, 2.1237322e-06
    %v189 = vadd.f32 %v188, 0.00028619796
    %v190 = vmul.f32 %v187, %v189
    %v191 = vadd.f32 %v190, 0.0036580483
    %v192 = vmul.f32 %v187, %v191
    %v193 = vadd.f32 %v192, 0.05243302
    %v194 = vmul.f32 %v187, %v193
    %v195 = vadd.f32 %v194, 0.18741608
    %v196 = vmul.f32 %v187, %v195
    %v197 = vadd.f32 %v196, 1.1283791
    %v198 = vmul.f32 %v143, %v197
    %v199 = vmul.f32 %v187, 3.8918573e-05
    %v200 = vadd.f32 %v199, 0.001143296
    %v201 = vmul.f32 %v187, %v200
    %v202 = vadd.f32 %v201, 0.014752088
    %v203 = vmul.f32 %v187, %v202
    %v204 = vadd.f32 %v203, 0.112945676
    %v205 = vmul.f32 %v187, %v204
    %v206 = vadd.f32 %v205, 0.4994258
    %v207 = vmul.f32 %v187, %v206
    %v208 = vadd.f32 %v207, 1.0
    %v209 = vrcp.pop %v208
    %v210 = vmul.f32 %v208, %v209
    %v211 = vsub.f32 1.0, %v210
    %v212 = vmul.f32 %v209, %v211
    %v213 = vadd.f32 %v209, %v212
    %vm214 = vweird.f32 %v208
    %vm215 = vweird.f32 %v209
    %vm216 = vmor %vm214, %vm215
    %v217 = vsel %vm216, %v209, %v213
    %v218 = vand.u32 2147483647, %v208
    %vm219 = vcmp.eq.f32.partialorder %v218, 8.507059e+37
    %v220 = vand.u32 %v208, 2147483648
    %v221 = vor.u32 1.1754944e-38, %v220
    %v222 = vsel %vm219, %v221, %v217
    %v223 = vmul.f32 %v198, %v222
    %v224 = vmin.f32 %v223, 1.0
    %v225 = vmax.f32 %v224, -1.0
    %v226 = vmul.f32 %v144, %v144
    %v227 = vmin.f32 16.0, %v226
    %v228 = vmul.f32 %v227, 2.1237322e-06
    %v229 = vadd.f32 %v228, 0.00028619796
    %v230 = vmul.f32 %v227, %v229
    %v231 = vadd.f32 %v230, 0.0036580483
    %v232 = vmul.f32 %v227, %v231
    %v233 = vadd.f32 %v232, 0.05243302
    %v234 = vmul.f32 %v227, %v233
    %v235 = vadd.f32 %v234, 0.18741608
    %v236 = vmul.f32 %v227, %v235
    %v237 = vadd.f32 %v236, 1.1283791
    %v238 = vmul.f32 %v144, %v237
    %v239 = vmul.f32 %v227, 3.8918573e-05
    %v240 = vadd.f32 %v239, 0.001143296
    %v241 = vmul.f32 %v227, %v240
    %v242 = vadd.f32 %v241, 0.014752088
    %v243 = vmul.f32 %v227, %v242
    %v244 = vadd.f32 %v243, 0.112945676
    %v245 = vmul.f32 %v227, %v244
    %v246 = vadd.f32 %v245, 0.4994258
    %v247 = vmul.f32 %v227, %v246
    %v248 = vadd.f32 %v247, 1.0
    %v249 = vrcp.pop %v248
    %v250 = vmul.f32 %v248, %v249
    %v251 = vsub.f32 1.0, %v250
    %v252 = vmul.f32 %v249, %v251
    %v253 = vadd.f32 %v249, %v252
    %vm254 = vweird.f32 %v248
    %vm255 = vweird.f32 %v249
    %vm256 = vmor %vm254, %vm255
    %v257 = vsel %vm256, %v249, %v253
    %v258 = vand.u32 2147483647, %v248
    %vm259 = vcmp.eq.f32.partialorder %v258, 8.507059e+37
    %v260 = vand.u32 %v248, 2147483648
    %v261 = vor.u32 1.1754944e-38, %v260
    %v262 = vsel %vm259, %v261, %v257
    %v263 = vmul.f32 %v238, %v262
    %v264 = vmin.f32 %v263, 1.0
    %v265 = vmax.f32 %v264, -1.0
    %v266 = vmul.f32 %v145, %v145
    %v267 = vmin.f32 16.0, %v266
    %v268 = vmul.f32 %v267, 2.1237322e-06
    %v269 = vadd.f32 %v268, 0.00028619796
    %v270 = vmul.f32 %v267, %v269
    %v271 = vadd.f32 %v270, 0.0036580483
    %v272 = vmul.f32 %v267, %v271
    %v273 = vadd.f32 %v272, 0.05243302
    %v274 = vmul.f32 %v267, %v273
    %v275 = vadd.f32 %v274, 0.18741608
    %v276 = vmul.f32 %v267, %v275
    %v277 = vadd.f32 %v276, 1.1283791
    %v278 = vmul.f32 %v145, %v277
    %v279 = vmul.f32 %v267, 3.8918573e-05
    %v280 = vadd.f32 %v279, 0.001143296
    %v281 = vmul.f32 %v267, %v280
    %v282 = vadd.f32 %v281, 0.014752088
    %v283 = vmul.f32 %v267, %v282
    %v284 = vadd.f32 %v283, 0.112945676
    %v285 = vmul.f32 %v267, %v284
    %v286 = vadd.f32 %v285, 0.4994258
    %v287 = vmul.f32 %v267, %v286
    %v288 = vadd.f32 %v287, 1.0
    %v289 = vrcp.pop %v288
    %v290 = vmul.f32 %v288, %v289
    %v291 = vsub.f32 1.0, %v290
    %v292 = vmul.f32 %v289, %v291
    %v293 = vadd.f32 %v289, %v292
    %vm294 = vweird.f32 %v288
    %vm295 = vweird.f32 %v289
    %vm296 = vmor %vm294, %vm295
    %v297 = vsel %vm296, %v289, %v293
    %v298 = vand.u32 2147483647, %v288
    %vm299 = vcmp.eq.f32.partialorder %v298, 8.507059e+37
    %v300 = vand.u32 %v288, 2147483648
    %v301 = vor.u32 1.1754944e-38, %v300
    %v302 = vsel %vm299, %v301, %v297
    %v303 = vmul.f32 %v278, %v302
    %v304 = vmin.f32 %v303, 1.0
    %v305 = vmax.f32 %v304, -1.0
    %v306 = vadd.f32 %v185, 1.0
    %v307 = vadd.f32 %v225, 1.0
    %v308 = vadd.f32 %v265, 1.0
    %v309 = vadd.f32 %v305, 1.0
    %v310 = vmul.f32 %v138, %v306
    %v311 = vmul.f32 %v139, %v307
    %v312 = vmul.f32 %v140, %v308
    %v313 = vmul.f32 %v141, %v309
    %v314 = vld [vmem:[#allocation4] sm:$0xff]
    %v315 = vld [vmem:[#allocation4 + $0x8] sm:$0xff]
    %v316 = vld [vmem:[#allocation4 + $0x10] sm:$0xff]
    %v317 = vld [vmem:[#allocation4 + $0x18] sm:$0xff]
    %v318 = vld [vmem:[#allocation4 + $0x20] sm:$0xff]
    %v319 = vld [vmem:[#allocation4 + $0x28] sm:$0xff]
    %v320 = vld [vmem:[#allocation4 + $0x30] sm:$0xff]
    %v321 = vld [vmem:[#allocation4 + $0x38] sm:$0xff]
    %v322 = vld [vmem:[#allocation4 + $0x40] sm:$0xff]
    %v323 = vld [vmem:[#allocation4 + $0x48] sm:$0xff]
    %v324 = vld [vmem:[#allocation4 + $0x50] sm:$0xff]
    %v325 = vld [vmem:[#allocation4 + $0x58] sm:$0xff]
    %v326 = vld [vmem:[#allocation4 + $0x60] sm:$0xff]
    %v327 = vld [vmem:[#allocation4 + $0x68] sm:$0xff]
    %v328 = vld [vmem:[#allocation4 + $0x70] sm:$0xff]
    %v329 = vld [vmem:[#allocation4 + $0x78] sm:$0xff]
    %v330 = vld [vmem:[#allocation4 + $0x80] sm:$0xff]
    %v331 = vld [vmem:[#allocation4 + $0x88] sm:$0xff]
    %v332 = vld [vmem:[#allocation4 + $0x90] sm:$0xff]
    %v333 = vld [vmem:[#allocation4 + $0x98] sm:$0xff]
    %v334 = vld [vmem:[#allocation4 + $0xa0] sm:$0xff]
    %v335 = vld [vmem:[#allocation4 + $0xa8] sm:$0xff]
    %v336 = vld [vmem:[#allocation4 + $0xb0] sm:$0xff]
    %v337 = vld [vmem:[#allocation4 + $0xb8] sm:$0xff]
    %v338 = vld [vmem:[#allocation4 + $0xc0] sm:$0xff]
    %v339 = vld [vmem:[#allocation4 + $0xc8] sm:$0xff]
    %v340 = vld [vmem:[#allocation4 + $0xd0] sm:$0xff]
    %v341 = vld [vmem:[#allocation4 + $0xd8] sm:$0xff]
    %v342 = vld [vmem:[#allocation4 + $0xe0] sm:$0xff]
    %v343 = vld [vmem:[#allocation4 + $0xe8] sm:$0xff]
    %v344 = vld [vmem:[#allocation4 + $0xf0] sm:$0xff]
    %v345 = vld [vmem:[#allocation4 + $0xf8] sm:$0xff]
    %v346 = vld [vmem:[%s4] sm:$0x1]
    %v348 = vperm.slane %v346, 0
    %350 = vmatpush.msra.mxu0 %v329
    %351 = vmatpush.msra.mxu0 %v328
    %352 = vmatpush.msra.mxu0 %v327
    %353 = vmatpush.msra.mxu0 %v326
    %354 = vmatpush.msra.mxu0 %v325
    %355 = vmatpush.msra.mxu0 %v324
    %356 = vmatpush.msra.mxu0 %v323
    %357 = vmatpush.msra.mxu0 %v322
    %358 = vmatpush.msra.mxu0 %v321
    %359 = vmatpush.msra.mxu0 %v320
    %360 = vmatpush.msra.mxu0 %v319
    %361 = vmatpush.msra.mxu0 %v318
    %362 = vmatpush.msra.mxu0 %v317
    %363 = vmatpush.msra.mxu0 %v316
    %364 = vmatpush.msra.mxu0 %v315
    %365 = vmatpush.msra.mxu0 %v314
    %366 = vmatmul.f32.gmra.mxu0 %v310
    %v367 = vpop.f32.mrf.mxu0
    %v368 = vadd.f32 %v348, %v367
    %369 = vmatmul.f32.gmra.mxu0 %v312
    %v370 = vpop.f32.mrf.mxu0
    %v371 = vadd.f32 %v348, %v370
    %372 = vdwg.mxu0
    %373 = vmatpush.msra.mxu0 %v345
    %374 = vmatpush.msra.mxu0 %v344
    %375 = vmatpush.msra.mxu0 %v343
    %376 = vmatpush.msra.mxu0 %v342
    %377 = vmatpush.msra.mxu0 %v341
    %378 = vmatpush.msra.mxu0 %v340
    %379 = vmatpush.msra.mxu0 %v339
    %380 = vmatpush.msra.mxu0 %v338
    %381 = vmatpush.msra.mxu0 %v337
    %382 = vmatpush.msra.mxu0 %v336
    %383 = vmatpush.msra.mxu0 %v335
    %384 = vmatpush.msra.mxu0 %v334
    %385 = vmatpush.msra.mxu0 %v333
    %386 = vmatpush.msra.mxu0 %v332
    %387 = vmatpush.msra.mxu0 %v331
    %388 = vmatpush.msra.mxu0 %v330
    %389 = vmatmul.f32.gmra.mxu0 %v311
    %v390 = vpop.f32.mrf.mxu0
    %v391 = vadd.f32 %v368, %v390
    %392 = vmatmul.f32.gmra.mxu0 %v313
    %v393 = vpop.f32.mrf.mxu0
    %v394 = vadd.f32 %v371, %v393
    %395 = vdwg.mxu0
    %396 = vst [vmem:[%s5] sm:$0xff] %v391
    %397 = vst [vmem:[%s5 + $0x8] sm:$0xff] %v394
    // Predicated region
    $region30: #{feed_forward_network.1} parent=1 // pred_check
      _
    $region31: #{feed_forward_network.1} parent=1 // pred_check_branch
      %399 = sbr.rel (0) target = $region33
    $region32: #{feed_forward_network.1} parent=1 // pred_region
      _
    $region33: #{feed_forward_network.1} parent=1 // pred_fallthru
      _
    // Predicated region
    $region34: #{feed_forward_network.1} parent=1 // pred_check
      _
    $region35: #{feed_forward_network.1} parent=1 // pred_check_branch
      %401 = sbr.rel (0) target = $region37
    $region36: #{feed_forward_network.1} parent=1 // pred_region
      _
    $region37: #{feed_forward_network.1} parent=1 // pred_fallthru
      _
    %402 = vsyncpa [#allocation3], 1
    %403 = vsyncpa [#allocation5], 1

</llo_original>
